<compile_context>
chip_gen: v5e
topology: v5e:2x2
jax: 0.10.0
libtpu: 0.0.40
codegen_flags: <defaults>
</compile_context>

<pallas_src>
import functools

import jax
import jax.numpy as jnp
from jax.experimental import pallas as pl
from jax.experimental.pallas import tpu as pltpu


# ----------------------------- tiling helpers ------------------------------

def _round_up(v, m):
    return ((v + m - 1) // m) * m


def _tile_and_pad(dim, max_tile, align):
    """Pick a tile (multiple of `align`, <= max_tile) and the padded dim it divides."""
    p = _round_up(dim, align)
    if p <= max_tile:
        return p, p
    best = align
    t = 2 * align
    while t <= max_tile:
        if p % t == 0:
            best = t
        t += align
    return best, p


def _pad2d(x, M, N):
    m, n = x.shape
    if (m, n) == (M, N):
        return x
    return jnp.pad(x, ((0, M - m), (0, N - n)))


# ----------------------------- Pallas kernels ------------------------------

def _matmul_kernel(x_ref, w_ref, b_ref, o_ref, acc_ref, *, relu):
    @pl.when(pl.program_id(2) == 0)
    def _():
        acc_ref[...] = jnp.zeros_like(acc_ref)

    acc_ref[...] += jnp.dot(x_ref[...].astype(jnp.bfloat16), w_ref[...],
                            preferred_element_type=jnp.float32)

    @pl.when(pl.program_id(2) == pl.num_programs(2) - 1)
    def _():
        y = acc_ref[...] + b_ref[...].astype(jnp.float32)
        if relu:
            y = jnp.maximum(y, 0.0)
        o_ref[...] = y.astype(o_ref.dtype)


def linear(x2d, w, b, relu=False):
    """y = relu?(x2d @ w + b). Tiled bf16 matmul with f32 accumulation."""
    M, K = x2d.shape
    K2, N = w.shape
    assert K == K2
    tm, Mp = _tile_and_pad(M, 256, 8)
    tk, Kp = _tile_and_pad(K, 512, 128)
    tn, Np = _tile_and_pad(N, 512, 128)
    xp = _pad2d(x2d, Mp, Kp)
    wp = _pad2d(w.astype(jnp.bfloat16), Kp, Np)
    bp = _pad2d(b.reshape(1, N).astype(jnp.float32), 1, Np)
    out = pl.pallas_call(
        functools.partial(_matmul_kernel, relu=relu),
        grid=(Mp // tm, Np // tn, Kp // tk),
        in_specs=[pl.BlockSpec((tm, tk), lambda i, j, k: (i, k)),
                  pl.BlockSpec((tk, tn), lambda i, j, k: (k, j)),
                  pl.BlockSpec((1, tn), lambda i, j, k: (0, j))],
        out_specs=pl.BlockSpec((tm, tn), lambda i, j, k: (i, j)),
        out_shape=jax.ShapeDtypeStruct((Mp, Np), x2d.dtype),
        scratch_shapes=[pltpu.VMEM((tm, tn), jnp.float32)],
        compiler_params=pltpu.CompilerParams(
            dimension_semantics=("parallel", "parallel", "arbitrary")),
    )(xp, wp, bp)
    return out[:M, :N]


def _ln_kernel(x_ref, g_ref, b_ref, o_ref, *, eps):
    x = x_ref[...].astype(jnp.float32)
    mean = jnp.mean(x, axis=-1, keepdims=True)
    xc = x - mean
    var = jnp.mean(xc * xc, axis=-1, keepdims=True)
    y = xc * jax.lax.rsqrt(var + eps)
    o_ref[...] = (y * g_ref[...] + b_ref[...]).astype(o_ref.dtype)


def layer_norm(x, g, b, eps=1e-5):
    shp = x.shape
    D = shp[-1]
    x2 = x.reshape(-1, D)
    M = x2.shape[0]
    tm, Mp = _tile_and_pad(M, 512, 8)
    x2 = _pad2d(x2, Mp, D)
    out = pl.pallas_call(
        functools.partial(_ln_kernel, eps=eps),
        grid=(Mp // tm,),
        in_specs=[pl.BlockSpec((tm, D), lambda i: (i, 0)),
                  pl.BlockSpec((1, D), lambda i: (0, 0)),
                  pl.BlockSpec((1, D), lambda i: (0, 0))],
        out_specs=pl.BlockSpec((tm, D), lambda i: (i, 0)),
        out_shape=jax.ShapeDtypeStruct((Mp, D), x.dtype),
        compiler_params=pltpu.CompilerParams(dimension_semantics=("parallel",)),
    )(x2, g.reshape(1, D), b.reshape(1, D))
    return out[:M].reshape(shp)


def _ln_res_mask_kernel(x_ref, d_ref, m_ref, g_ref, b_ref, o_ref, *, eps):
    x = x_ref[...].astype(jnp.float32) + d_ref[...].astype(jnp.float32)
    mean = jnp.mean(x, axis=-1, keepdims=True)
    xc = x - mean
    var = jnp.mean(xc * xc, axis=-1, keepdims=True)
    y = xc * jax.lax.rsqrt(var + eps)
    y = y * g_ref[...] + b_ref[...]
    o_ref[...] = (y * m_ref[...]).astype(o_ref.dtype)


def ln_residual_mask(x2d, delta2d, mask2d, g, b, eps=1e-5):
    """LayerNorm(x + delta) * mask, fused (one HBM pass)."""
    M, D = x2d.shape
    tm, Mp = _tile_and_pad(M, 512, 8)
    xp = _pad2d(x2d, Mp, D)
    dp = _pad2d(delta2d, Mp, D)
    mp = _pad2d(mask2d, Mp, 1)
    out = pl.pallas_call(
        functools.partial(_ln_res_mask_kernel, eps=eps),
        grid=(Mp // tm,),
        in_specs=[pl.BlockSpec((tm, D), lambda i: (i, 0)),
                  pl.BlockSpec((tm, D), lambda i: (i, 0)),
                  pl.BlockSpec((tm, 1), lambda i: (i, 0)),
                  pl.BlockSpec((1, D), lambda i: (0, 0)),
                  pl.BlockSpec((1, D), lambda i: (0, 0))],
        out_specs=pl.BlockSpec((tm, D), lambda i: (i, 0)),
        out_shape=jax.ShapeDtypeStruct((Mp, D), x2d.dtype),
        compiler_params=pltpu.CompilerParams(dimension_semantics=("parallel",)),
    )(xp, dp, mp, g.reshape(1, D), b.reshape(1, D))
    return out[:M]


def _mha_kernel(qkv_ref, pad_ref, o_ref, *, n_head, d_head, scale):
    qkv = qkv_ref[...]                                            # (T, 3*H*Dh)
    bias = jnp.where(pad_ref[...] > 0.5, jnp.float32(-1e30), jnp.float32(0.0))  # (1, T)
    hd = n_head * d_head
    outs = []
    # TODO(synk): for very long T add a kv-block grid axis (flash-style online
    # softmax) instead of the full (T,T) score tile; fine at FastPitch sizes.
    for h in range(n_head):
        q = qkv[:, h * d_head:(h + 1) * d_head].astype(jnp.bfloat16)
        k = qkv[:, hd + h * d_head:hd + (h + 1) * d_head].astype(jnp.bfloat16)
        v = qkv[:, 2 * hd + h * d_head:2 * hd + (h + 1) * d_head].astype(jnp.bfloat16)
        s = jax.lax.dot_general(q, k, (((1,), (1,)), ((), ())),
                                preferred_element_type=jnp.float32) * scale
        s = s + bias                                              # mask padded keys
        m = jnp.max(s, axis=-1, keepdims=True)
        e = jnp.exp(s - m)
        denom = jnp.sum(e, axis=-1, keepdims=True)
        p = e * pl.reciprocal(denom, approx=True)                 # EUP, frees VALU
        outs.append(jnp.dot(p.astype(jnp.bfloat16), v,
                            preferred_element_type=jnp.float32))
    o_ref[...] = jnp.concatenate(outs, axis=-1).astype(o_ref.dtype)


def mha_attention(qkv, pad_mask, n_head, d_head):
    """qkv: (B, T, 3*H*Dh) packed (no transposes); pad_mask: (B,1,T), 1.0 at pads."""
    B, T, C = qkv.shape
    hd = n_head * d_head
    scale = 1.0 / (d_head ** 0.5)
    return pl.pallas_call(
        functools.partial(_mha_kernel, n_head=n_head, d_head=d_head, scale=scale),
        grid=(B,),
        in_specs=[pl.BlockSpec((None, T, C), lambda b: (b, 0, 0)),
                  pl.BlockSpec((None, 1, T), lambda b: (b, 0, 0))],
        out_specs=pl.BlockSpec((None, T, hd), lambda b: (b, 0, 0)),
        out_shape=jax.ShapeDtypeStruct((B, T, hd), qkv.dtype),
        compiler_params=pltpu.CompilerParams(dimension_semantics=("parallel",)),
    )(qkv, pad_mask)


def _conv_accumulate(x, w_ref, b_ref, o_ref, K, T, relu):
    cout = o_ref.shape[-1]
    acc = jnp.zeros((T, cout), jnp.float32)
    for k in range(K):                                            # K shifted matmuls
        xk = jax.lax.slice_in_dim(x, k, k + T, axis=0).astype(jnp.bfloat16)
        acc = acc + jnp.dot(xk, w_ref[k], preferred_element_type=jnp.float32)
    acc = acc + b_ref[...].astype(jnp.float32)
    if relu:
        acc = jnp.maximum(acc, 0.0)
    o_ref[...] = acc.astype(o_ref.dtype)


def _conv1d_kernel(x_ref, w_ref, b_ref, o_ref, *, K, T, relu):
    _conv_accumulate(x_ref[...], w_ref, b_ref, o_ref, K, T, relu)


def _conv1d_mask_kernel(x_ref, m_ref, w_ref, b_ref, o_ref, *, K, T, relu):
    _conv_accumulate(x_ref[...] * m_ref[...], w_ref, b_ref, o_ref, K, T, relu)


def conv1d_ntc(x, w_kio, b, relu=False, mask=None):
    """'same' 1D conv, channels-last, no im2col.  x: (B,T,Cin); w_kio: (K,Cin,Cout).
    Optional mask (B,T,1) is fused as x*mask inside the kernel."""
    B, T, Cin = x.shape
    K, Cin2, Cout = w_kio.shape
    assert Cin == Cin2 and K % 2 == 1
    pad = K // 2
    Tp = T + 2 * pad
    xp = jnp.pad(x, ((0, 0), (pad, pad), (0, 0)))
    args = [xp]
    in_specs = [pl.BlockSpec((None, Tp, Cin), lambda bb: (bb, 0, 0))]
    if mask is None:
        kern = functools.partial(_conv1d_kernel, K=K, T=T, relu=relu)
    else:
        kern = functools.partial(_conv1d_mask_kernel, K=K, T=T, relu=relu)
        mp = jnp.pad(mask.astype(x.dtype), ((0, 0), (pad, pad), (0, 0)))
        args.append(mp)
        in_specs.append(pl.BlockSpec((None, Tp, 1), lambda bb: (bb, 0, 0)))
    args += [w_kio.astype(jnp.bfloat16), b.reshape(1, Cout).astype(jnp.float32)]
    in_specs += [pl.BlockSpec((K, Cin, Cout), lambda bb: (0, 0, 0)),
                 pl.BlockSpec((1, Cout), lambda bb: (0, 0))]
    # TODO(synk): tile T with overlapping windows for very long sequences /
    # v7x's 64 MiB VMEM; full-T per-batch blocks fit comfortably at FastPitch sizes.
    return pl.pallas_call(
        kern,
        grid=(B,),
        in_specs=in_specs,
        out_specs=pl.BlockSpec((None, T, Cout), lambda bb: (bb, 0, 0)),
        out_shape=jax.ShapeDtypeStruct((B, T, Cout), x.dtype),
        compiler_params=pltpu.CompilerParams(dimension_semantics=("parallel",)),
    )(*args)


def _regulate_kernel(lo_ref, hi_ref, enc_ref, o_ref, *, tf):
    frame0 = pl.program_id(1) * tf
    frames = (frame0 + jax.lax.broadcasted_iota(jnp.int32, (tf, 1), 0)).astype(jnp.float32)
    # one-hot expansion mask generated on the fly (never materialized in HBM)
    mult = jnp.logical_and(lo_ref[...] <= frames, hi_ref[...] > frames).astype(jnp.float32)
    o_ref[...] = jnp.dot(mult, enc_ref[...].astype(jnp.float32),
                         preferred_element_type=jnp.float32).astype(o_ref.dtype)


def regulate_len(durations, enc_out, pace=1.0, mel_max_len=None):
    B, T, D = enc_out.shape
    reps = jnp.floor(durations.astype(jnp.float32) / pace + 0.5).astype(jnp.int32)
    dec_lens = jnp.sum(reps, axis=1)
    max_len = 870                     # matches the PyTorch reference constant
    tf = 128
    Fp = _round_up(max_len, tf)       # lane/sublane-friendly padded frame count
    # duration cumsum bounds kept in f32 (exact for these integer magnitudes)
    cs = jnp.cumsum(jnp.pad(reps, ((0, 0), (1, 0))), axis=1).astype(jnp.float32)
    lo = cs[:, :-1][:, None, :]       # (B,1,T)
    hi = cs[:, 1:][:, None, :]
    enc_rep = pl.pallas_call(
        functools.partial(_regulate_kernel, tf=tf),
        grid=(B, Fp // tf),
        in_specs=[pl.BlockSpec((None, 1, T), lambda b, f: (b, 0, 0)),
                  pl.BlockSpec((None, 1, T), lambda b, f: (b, 0, 0)),
                  pl.BlockSpec((None, T, D), lambda b, f: (b, 0, 0))],
        out_specs=pl.BlockSpec((None, tf, D), lambda b, f: (b, f, 0)),
        out_shape=jax.ShapeDtypeStruct((B, Fp, D), enc_out.dtype),
        compiler_params=pltpu.CompilerParams(
            dimension_semantics=("parallel", "parallel")),
    )(lo, hi, enc_out)
    enc_rep = enc_rep[:, :max_len]
    if mel_max_len:
        enc_rep = enc_rep[:, :mel_max_len]
        dec_lens = jnp.minimum(dec_lens, mel_max_len)
    return enc_rep, dec_lens


# ----------------------------- model pieces --------------------------------

def multi_head_attn(x, pad_mask, mask2d, p):
    B, T, D = x.shape
    H, Dh = p['n_head'], p['d_head']
    qkv = linear(x.reshape(B * T, D), p['qkv_w'], p['qkv_b']).reshape(B, T, 3 * H * Dh)
    av = mha_attention(qkv, pad_mask, H, Dh)                       # (B,T,H*Dh)
    attn_out = linear(av.reshape(B * T, H * Dh), p['o_w'], p['o_b'])
    y = ln_residual_mask(x.reshape(B * T, D), attn_out, mask2d, p['ln_g'], p['ln_b'])
    return y.reshape(B, T, D)                                      # LN(x+attn)*mask


def pos_conv_ff(x, mask2d, p):
    B, T, D = x.shape
    h = conv1d_ntc(x, p['conv1_w'], p['conv1_b'], relu=True)
    h = conv1d_ntc(h, p['conv2_w'], p['conv2_b'], relu=False)
    y = ln_residual_mask(x.reshape(B * T, D), h.reshape(B * T, D), mask2d,
                         p['ln_g'], p['ln_b'])
    return y.reshape(B, T, D)                                      # LN(x+ff)*mask


def fft_transformer(p, inp=None, ids=None, seq_lens=None, padding_idx=0, conditioning=0.0):
    if ids is not None:
        x = p['word_emb'][ids]                      # embedding gather (JAX glue)
        mask = (ids != padding_idx)[..., None]      # (B,T,1) bool
    else:
        x = inp
        T = x.shape[1]
        # TODO(synk): torch uses dynamic max_len = seq_lens.max(); static seq len here
        mask = (jnp.arange(T)[None, :] < seq_lens[:, None])[..., None]
    B, T, D = x.shape
    maskf = mask.astype(x.dtype)                    # (B,T,1)
    mask2d = maskf.reshape(B * T, 1)
    pos = jnp.arange(T, dtype=jnp.float32)
    sinusoid = pos[:, None] * p['inv_freq'][None, :]
    pos_emb = jnp.concatenate([jnp.sin(sinusoid), jnp.cos(sinusoid)], axis=1)  # (T,D)
    out = x + pos_emb[None].astype(x.dtype) * maskf + conditioning
    pad_mask = (1.0 - maskf[..., 0])[:, None, :]    # (B,1,T), 1.0 at padded keys
    for layer in p['layers']:
        out = multi_head_attn(out, pad_mask, mask2d, layer['attn'])
        out = pos_conv_ff(out, mask2d, layer['ff'])
    return out, mask


def temporal_predictor(enc_out, enc_mask_f, p):
    # TODO(synk): the duration/pitch predictors' first convs (same enc_out input)
    # could share one fused conv by concatenating output channels.
    B, T, D = enc_out.shape
    out = enc_out
    for i, lp in enumerate(p['layers']):
        out = conv1d_ntc(out, lp['conv_w'], lp['conv_b'], relu=True,
                         mask=enc_mask_f if i == 0 else None)   # ConvReLU (+fused mask)
        out = layer_norm(out, lp['ln_g'], lp['ln_b'])           # Norm over channels
    F = out.shape[-1]
    out = linear(out.reshape(B * T, F), p['fc_w'], p['fc_b']).reshape(B, T, 1)
    out = out * enc_mask_f
    return out[..., 0]


def fastpitch_forward(params, cfg, inputs, mel_tgt, dur_tgt, pitch_tgt,
                      use_gt_durations=True, use_gt_pitch=True, pace=1.0, max_duration=75):
    mel_max_len = mel_tgt.shape[2]
    # speaker_emb is None (n_speakers == 1) -> conditioning = 0
    enc_out, enc_mask = fft_transformer(params['encoder'], ids=inputs,
                                        padding_idx=cfg['padding_idx'])
    enc_mask_f = enc_mask.astype(enc_out.dtype)

    log_dur_pred = temporal_predictor(enc_out, enc_mask_f, params['dur_pred'])
    dur_pred = jnp.clip(jnp.exp(log_dur_pred) - 1.0, 0.0, max_duration)
    pitch_pred = temporal_predictor(enc_out, enc_mask_f, params['pitch_pred'])

    pitch_in = pitch_tgt if (use_gt_pitch and pitch_tgt is not None) else pitch_pred
    pitch_emb = conv1d_ntc(pitch_in[..., None], params['pitch_emb_w'], params['pitch_emb_b'])
    enc_out = enc_out + pitch_emb

    durs = dur_tgt if use_gt_durations else dur_pred
    len_regulated, dec_lens = regulate_len(durs, enc_out, pace, mel_max_len)

    dec_out, _ = fft_transformer(params['decoder'], inp=len_regulated, seq_lens=dec_lens)
    B, Tm, D = dec_out.shape
    mel_out = linear(dec_out.reshape(B * Tm, D), params['proj_w'], params['proj_b'])
    mel_out = mel_out.reshape(B, Tm, cfg['n_mel_channels'])
    return mel_out, log_dur_pred, pitch_pred


# ------------------------- deterministic parameters ------------------------

def init_params(seed, cfg):
    state = [jax.random.PRNGKey(seed)]

    def nk():
        state[0], sub = jax.random.split(state[0])
        return sub

    def w(shape, scale=0.02):
        return scale * jax.random.normal(nk(), shape, dtype=jnp.float32)

    def wmm(shape, scale=0.02):             # matmul weights stored bf16 (MXU native)
        return w(shape, scale).astype(jnp.bfloat16)

    def wconv(cout, cin, k, scale=0.02):    # torch (Cout,Cin,K) -> (K,Cin,Cout) bf16
        return jnp.transpose(w((cout, cin, k), scale), (2, 1, 0)).astype(jnp.bfloat16)

    D = cfg['symbols_embedding_dim']

    def fft_params(n_layer, n_head, d_head, d_inner, kernel_size, embed_input):
        p = {'inv_freq': 1.0 / (10000.0 ** (jnp.arange(0.0, D, 2.0) / D)),
             'layers': []}
        if embed_input:
            emb = w((cfg['n_symbols'], D), 1.0)
            emb = emb.at[cfg['padding_idx']].set(0.0)   # padding_idx row is zero
            p['word_emb'] = emb
        for _ in range(n_layer):
            attn = {'n_head': n_head, 'd_head': d_head,
                    'qkv_w': wmm((D, 3 * n_head * d_head)),
                    'qkv_b': w((3 * n_head * d_head,)),
                    'o_w': wmm((n_head * d_head, D)),
                    'o_b': jnp.zeros((D,), jnp.float32),          # o_net has bias=False
                    'ln_g': jnp.ones((D,), jnp.float32),
                    'ln_b': jnp.zeros((D,), jnp.float32)}
            ff = {'conv1_w': wconv(d_inner, D, kernel_size),
                  'conv1_b': w((d_inner,)),
                  'conv2_w': wconv(D, d_inner, kernel_size),
                  'conv2_b': w((D,)),
                  'ln_g': jnp.ones((D,), jnp.float32),
                  'ln_b': jnp.zeros((D,), jnp.float32)}
            p['layers'].append({'attn': attn, 'ff': ff})
        return p

    def predictor_params(input_size, filter_size, kernel_size, n_layers):
        layers = []
        for i in range(n_layers):
            cin = input_size if i == 0 else filter_size
            layers.append({'conv_w': wconv(filter_size, cin, kernel_size),
                           'conv_b': w((filter_size,)),
                           'ln_g': jnp.ones((filter_size,), jnp.float32),
                           'ln_b': jnp.zeros((filter_size,), jnp.float32)})
        return {'layers': layers,
                'fc_w': wmm((filter_size, 1)),
                'fc_b': w((1,))}

    return {
        'encoder': fft_params(cfg['in_fft_n_layers'], cfg['in_fft_n_heads'],
                              cfg['in_fft_d_head'], cfg['in_fft_conv1d_filter_size'],
                              cfg['in_fft_conv1d_kernel_size'], True),
        'decoder': fft_params(cfg['out_fft_n_layers'], cfg['out_fft_n_heads'],
                              cfg['out_fft_d_head'], cfg['out_fft_conv1d_filter_size'],
                              cfg['out_fft_conv1d_kernel_size'], False),
        'dur_pred': predictor_params(cfg['in_fft_output_size'],
                                     cfg['dur_predictor_filter_size'],
                                     cfg['dur_predictor_kernel_size'],
                                     cfg['dur_predictor_n_layers']),
        'pitch_pred': predictor_params(cfg['in_fft_output_size'],
                                       cfg['pitch_predictor_filter_size'],
                                       cfg['pitch_predictor_kernel_size'],
                                       cfg['pitch_predictor_n_layers']),
        'pitch_emb_w': wconv(D, 1, cfg['pitch_embedding_kernel_size']),
        'pitch_emb_b': w((D,)),
        'proj_w': wmm((cfg['out_fft_output_size'], cfg['n_mel_channels'])),
        'proj_b': w((cfg['n_mel_channels'],)),
    }


# ---------------------------------- main -----------------------------------

if __name__ == "__main__":
    cfg = dict(
        n_mel_channels=16, n_symbols=50, padding_idx=0, symbols_embedding_dim=32,
        in_fft_n_layers=1, in_fft_n_heads=2, in_fft_d_head=16,
        in_fft_conv1d_kernel_size=3, in_fft_conv1d_filter_size=64, in_fft_output_size=32,
        out_fft_n_layers=1, out_fft_n_heads=2, out_fft_d_head=16,
        out_fft_conv1d_kernel_size=3, out_fft_conv1d_filter_size=64, out_fft_output_size=32,
        dur_predictor_kernel_size=3, dur_predictor_filter_size=32, dur_predictor_n_layers=2,
        pitch_predictor_kernel_size=3, pitch_predictor_filter_size=32, pitch_predictor_n_layers=2,
        pitch_embedding_kernel_size=3,
    )
    params = init_params(0, cfg)

    key = jax.random.PRNGKey(0)
    k1, k2 = jax.random.split(key)
    B, T = 2, 8
    inputs = jax.random.randint(k1, (B, T), 1, cfg['n_symbols'], dtype=jnp.int32)
    inputs = inputs.at[1, 6:].set(cfg['padding_idx'])        # batch 1 has 2 padded tokens
    dur_tgt = jnp.array([[3., 3., 3., 3., 3., 3., 3., 3.],
                         [4., 4., 4., 4., 2., 2., 0., 0.]], dtype=jnp.float32)
    mel_max_len = 24                                          # = max(sum(dur_tgt, axis=1))
    mel_tgt = jnp.zeros((B, cfg['n_mel_channels'], mel_max_len), dtype=jnp.float32)
    pitch_tgt = jax.random.normal(k2, (B, T), dtype=jnp.float32)

    mel_out, log_dur_pred, pitch_pred = fastpitch_forward(
        params, cfg, inputs, mel_tgt, dur_tgt, pitch_tgt,
        use_gt_durations=True, use_gt_pitch=True, pace=1.0, max_duration=75)
    jax.block_until_ready((mel_out, log_dur_pred, pitch_pred))

    assert mel_out.shape == (B, mel_max_len, cfg['n_mel_channels'])
    assert log_dur_pred.shape == (B, T)
    assert pitch_pred.shape == (B, T)
    assert bool(jnp.all(jnp.isfinite(mel_out)))
    assert bool(jnp.all(jnp.isfinite(log_dur_pred)))
    assert bool(jnp.all(jnp.isfinite(pitch_pred)))
    print("KERNEL_OK")
</pallas_src>

<mosaic_0001>
module attributes {stable_mosaic.version = 11 : i64} {
  func.func @_matmul_kernel(%arg0: i32, %arg1: i32, %arg2: i32, %arg3: memref<16x128xf32, #tpu.memory_space<vmem>>, %arg4: memref<128x128xbf16, #tpu.memory_space<vmem>>, %arg5: memref<1x128xf32, #tpu.memory_space<vmem>>, %arg6: memref<16x128xf32, #tpu.memory_space<vmem>>, %arg7: memref<16x128xf32, #tpu.memory_space<vmem>>) attributes {dimension_semantics = [#tpu.dimension_semantics<parallel>, #tpu.dimension_semantics<parallel>, #tpu.dimension_semantics<arbitrary>], iteration_bounds = array<i64: 1, 1, 1>, scalar_prefetch = 0 : i64, scratch_operands = 1 : i64, tpu.core_type = #tpu.core_type<tc>, window_params = [{transform_indices = @transform_0, window_bounds = array<i64: 16, 128>}, {transform_indices = @transform_1, window_bounds = array<i64: 128, 128>}, {transform_indices = @transform_2, window_bounds = array<i64: 1, 128>}, {transform_indices = @transform_3, window_bounds = array<i64: 16, 128>}]} {
    %c0_i32 = arith.constant 0 : i32
    %0 = arith.cmpi eq, %arg2, %c0_i32 : i32
    %1 = arith.extui %0 : i1 to i32
    %c0_i32_0 = arith.constant 0 : i32
    %2 = arith.cmpi ne, %1, %c0_i32_0 : i32
    scf.if %2 {
      %cst_10 = arith.constant 0.000000e+00 : f32
      %13 = vector.broadcast %cst_10 : f32 to vector<16x128xf32>
      %c0_11 = arith.constant 0 : index
      %c0_12 = arith.constant 0 : index
      %14 = vector.load %arg7[%c0_11, %c0_12] : memref<16x128xf32, #tpu.memory_space<vmem>>, vector<16x128xf32>
      tpu.vector_store %arg7[%c0_11, %c0_12], %13 {strides = array<i32>} : memref<16x128xf32, #tpu.memory_space<vmem>>, vector<16x128xf32>,
    } else {
    }
    %c0 = arith.constant 0 : index
    %c0_1 = arith.constant 0 : index
    %3 = vector.load %arg7[%c0, %c0_1] : memref<16x128xf32, #tpu.memory_space<vmem>>, vector<16x128xf32>
    %c0_2 = arith.constant 0 : index
    %c0_3 = arith.constant 0 : index
    %4 = vector.load %arg3[%c0_2, %c0_3] : memref<16x128xf32, #tpu.memory_space<vmem>>, vector<16x128xf32>
    %5 = arith.truncf %4 : vector<16x128xf32> to vector<16x128xbf16>
    %c0_4 = arith.constant 0 : index
    %c0_5 = arith.constant 0 : index
    %6 = vector.load %arg4[%c0_4, %c0_5] : memref<128x128xbf16, #tpu.memory_space<vmem>>, vector<128x128xbf16>
    %cst = arith.constant dense<0.000000e+00> : vector<16x128xf32>
    %7 = tpu.matmul %5, %6, %cst {dimension_numbers = #tpu.dot_dimension_numbers<[1], [0], [0], [1], [0, 0, 1, 1], [], []>} : vector<16x128xbf16>, vector<128x128xbf16>, vector<16x128xf32> -> vector<16x128xf32>
    %8 = arith.addf %3, %7 : vector<16x128xf32>
    %c0_6 = arith.constant 0 : index
    %c0_7 = arith.constant 0 : index
    %9 = vector.load %arg7[%c0_6, %c0_7] : memref<16x128xf32, #tpu.memory_space<vmem>>, vector<16x128xf32>
    tpu.vector_store %arg7[%c0_6, %c0_7], %8 {strides = array<i32>} : memref<16x128xf32, #tpu.memory_space<vmem>>, vector<16x128xf32>,
    %c0_i32_8 = arith.constant 0 : i32
    %10 = arith.cmpi eq, %arg2, %c0_i32_8 : i32
    %11 = arith.extui %10 : i1 to i32
    %c0_i32_9 = arith.constant 0 : i32
    %12 = arith.cmpi ne, %11, %c0_i32_9 : i32
    scf.if %12 {
      %c0_10 = arith.constant 0 : index
      %c0_11 = arith.constant 0 : index
      %13 = vector.load %arg7[%c0_10, %c0_11] : memref<16x128xf32, #tpu.memory_space<vmem>>, vector<16x128xf32>
      %c0_12 = arith.constant 0 : index
      %c0_13 = arith.constant 0 : index
      %14 = vector.load %arg5[%c0_12, %c0_13] : memref<1x128xf32, #tpu.memory_space<vmem>>, vector<1x128xf32>
      %15 = vector.broadcast %14 : vector<1x128xf32> to vector<16x128xf32>
      %16 = arith.addf %13, %15 : vector<16x128xf32>
      %c0_14 = arith.constant 0 : index
      %c0_15 = arith.constant 0 : index
      %17 = vector.load %arg6[%c0_14, %c0_15] : memref<16x128xf32, #tpu.memory_space<vmem>>, vector<16x128xf32>
      tpu.vector_store %arg6[%c0_14, %c0_15], %16 {strides = array<i32>} : memref<16x128xf32, #tpu.memory_space<vmem>>, vector<16x128xf32>,
    } else {
    }
    return
  }
  func.func @transform_0(%arg0: i32, %arg1: i32, %arg2: i32) -> (i32, i32) {
    %c0_i32 = arith.constant 0 : i32
    return %arg0, %arg2 : i32, i32
  }
  func.func @transform_1(%arg0: i32, %arg1: i32, %arg2: i32) -> (i32, i32) {
    %c0_i32 = arith.constant 0 : i32
    return %arg2, %arg1 : i32, i32
  }
  func.func @transform_2(%arg0: i32, %arg1: i32, %arg2: i32) -> (i32, i32) {
    %c0_i32 = arith.constant 0 : i32
    %c0_i32_0 = arith.constant 0 : i32
    return %c0_i32, %arg1 : i32, i32
  }
  func.func @transform_3(%arg0: i32, %arg1: i32, %arg2: i32) -> (i32, i32) {
    %c0_i32 = arith.constant 0 : i32
    return %arg0, %arg1 : i32, i32
  }
}

</mosaic_0001>

<llo_original>
// kernel: tpu_custom_call.1
$region0: #{tpu_custom_call.1}
  #allocation0 [shape = 'u32[]', space=smem, size = 0x4, offset = 0x4, fixed_abs, tag = 'smem constant byte address 0x4 - core index']
  #allocation1 [shape = 'u32[72,128]{1,0:T(1,128)}', space=vmem, size = 0x9000, scoped, tag = 'internal scratch']
  #allocation2 [shape = 'f32[16,128]{1,0:T(8,128)}', space=vmem, size = 0x2000, scoped, tag = 'scratch operand']
  %s0 = inlined_call_operand.hbm [shape: f32[16,128], index: 0, kind: input, shape index: {}]
  %s1 = inlined_call_operand.hbm [shape: bf16[128,128], index: 1, kind: input, shape index: {}]
  %s2 = inlined_call_operand.vmem [shape: f32[1,128], index: 2, kind: input, shape index: {}]
  %s3 = inlined_call_operand.hbm [shape: f32[16,128], index: 3, kind: output, shape index: {}]
  %s4 = sld [smem:[#allocation0]]
  $region38: #{tpu_custom_call.1} parent=0
    _
  %s6 = ssub.s32 1, %s4
  %s7 = scalar_select 0, %s6, %s4
  $region1: #{tpu_custom_call.1} parent=0
    #allocation3 [shape = 'u8[8192]{0}', space=vmem, size = 0x2000, scoped, tag = 'input window, operand 0, single buffered']
    #allocation4 [shape = 's32[1]{0}', space=sflag, size = 0x4, scoped, tag = 'scoped memory for tpu_custom_call.1']
    #allocation5 [shape = 's32[1]{0}', space=sflag, size = 0x4, scoped, tag = 'scoped memory for tpu_custom_call.1']
    #allocation6 [shape = 'u8[32768]{0}', space=vmem, size = 0x8000, scoped, tag = 'input window, operand 1, single buffered']
    #allocation7 [shape = 's32[1]{0}', space=sflag, size = 0x4, scoped, tag = 'scoped memory for tpu_custom_call.1']
    #allocation8 [shape = 'u8[8192]{0}', space=vmem, size = 0x2000, scoped, tag = 'output window, operand 0, single buffered']
    %8 = vsyncpa [#allocation4], 0
    %9 = vsyncpa [#allocation7], 0
    %10 = vsyncpa [#allocation5], 0
    // Predicated region
    $region2: #{tpu_custom_call.1} parent=1 // pred_check
      _
    $region3: #{tpu_custom_call.1} parent=1 // pred_check_branch
      %12 = sbr.rel (0) target = $region5
    $region4: #{tpu_custom_call.1} parent=1 // pred_region
      %14 = vsyncadd [#allocation4], 0
      %s15 = sshll.u32 %s0, 4
      %s16 = int_to_ptr.hbm [resolvable:$true] %s15
      %s17 = sshll.u32 [#allocation3], 4
      %s18 = int_to_ptr.vmem [resolvable:$true] %s17
      %23 = dma.hbm_to_vmem [thread:$0]  %s16, 256, %s18, [#allocation4], 128, 128, 8
    $region5: #{tpu_custom_call.1} parent=1 // pred_fallthru
      _
    // Predicated region
    $region6: #{tpu_custom_call.1} parent=1 // pred_check
      _
    $region7: #{tpu_custom_call.1} parent=1 // pred_check_branch
      %25 = sbr.rel (0) target = $region9
    $region8: #{tpu_custom_call.1} parent=1 // pred_region
      %27 = vsyncadd [#allocation7], 0
      %s28 = sshll.u32 %s1, 4
      %s29 = int_to_ptr.hbm [resolvable:$true] %s28
      %s30 = sshll.u32 [#allocation6], 4
      %s31 = int_to_ptr.vmem [resolvable:$true] %s30
      %36 = dma.hbm_to_vmem [thread:$0]  %s29, 1024, %s31, [#allocation7], 64, 64, 4
    $region9: #{tpu_custom_call.1} parent=1 // pred_fallthru
      _
    // Predicated region
    $region10: #{tpu_custom_call.1} parent=1 // pred_check
      _
    $region11: #{tpu_custom_call.1} parent=1 // pred_check_branch
      %38 = sbr.rel (0) target = $region13
    $region12: #{tpu_custom_call.1} parent=1 // pred_region
      _
    $region13: #{tpu_custom_call.1} parent=1 // pred_fallthru
      _
    // Predicated region
    $region14: #{tpu_custom_call.1} parent=1 // pred_check
      _
    $region15: #{tpu_custom_call.1} parent=1 // pred_check_branch
      %40 = sbr.rel (0) target = $region17
    $region16: #{tpu_custom_call.1} parent=1 // pred_region
      %42 = dma.done [#allocation4], 256
    $region17: #{tpu_custom_call.1} parent=1 // pred_fallthru
      _
    // Predicated region
    $region18: #{tpu_custom_call.1} parent=1 // pred_check
      _
    $region19: #{tpu_custom_call.1} parent=1 // pred_check_branch
      %44 = sbr.rel (0) target = $region21
    $region20: #{tpu_custom_call.1} parent=1 // pred_region
      %46 = dma.done [#allocation7], 1024
    $region21: #{tpu_custom_call.1} parent=1 // pred_fallthru
      _
    %p47 = scmp.eq.s32.totalorder 0, 0
    // Predicated region
    $region22: #{tpu_custom_call.1} parent=1 // pred_check
      %p48 = pneg %p47
    $region23: #{tpu_custom_call.1} parent=1 // pred_check_branch
      %50 = sbr.rel (%p48) target = $region25
    $region24: #{tpu_custom_call.1} parent=1 // pred_region
      %51 = vst [vmem:[#allocation2] sm:$0xff] 0.0
      %52 = vst [vmem:[#allocation2 + $0x8] sm:$0xff] 0.0
    $region25: #{tpu_custom_call.1} parent=1 // pred_fallthru
      _
    %v53 = vld [vmem:[#allocation2] sm:$0xff]
    %v54 = vld [vmem:[#allocation2 + $0x8] sm:$0xff]
    %v55 = vld [vmem:[#allocation3] sm:$0xff]
    %v56 = vld [vmem:[#allocation3 + $0x8] sm:$0xff]
    %v57 = vpack.c.bf16 %v56, %v55
    %v58 = vld [vmem:[#allocation6] sm:$0xf]
    %v59 = vld [vmem:[#allocation6 + $0x4] sm:$0xf]
    %v60 = vld [vmem:[#allocation6 + $0x8] sm:$0xf]
    %v61 = vld [vmem:[#allocation6 + $0xc] sm:$0xf]
    %v62 = vld [vmem:[#allocation6 + $0x10] sm:$0xf]
    %v63 = vld [vmem:[#allocation6 + $0x14] sm:$0xf]
    %v64 = vld [vmem:[#allocation6 + $0x18] sm:$0xf]
    %v65 = vld [vmem:[#allocation6 + $0x1c] sm:$0xf]
    %v66 = vld [vmem:[#allocation6 + $0x20] sm:$0xf]
    %v67 = vld [vmem:[#allocation6 + $0x24] sm:$0xf]
    %v68 = vld [vmem:[#allocation6 + $0x28] sm:$0xf]
    %v69 = vld [vmem:[#allocation6 + $0x2c] sm:$0xf]
    %v70 = vld [vmem:[#allocation6 + $0x30] sm:$0xf]
    %v71 = vld [vmem:[#allocation6 + $0x34] sm:$0xf]
    %v72 = vld [vmem:[#allocation6 + $0x38] sm:$0xf]
    %v73 = vld [vmem:[#allocation6 + $0x3c] sm:$0xf]
    %v90 = vunpack.c.l.b16 %v58
    %v91 = vunpack.c.l.b16 %v59
    %v92 = vunpack.c.l.b16 %v60
    %v93 = vunpack.c.l.b16 %v61
    %v94 = vunpack.c.l.b16 %v62
    %v95 = vunpack.c.l.b16 %v63
    %v96 = vunpack.c.l.b16 %v64
    %v97 = vunpack.c.l.b16 %v65
    %v98 = vunpack.c.l.b16 %v66
    %v99 = vunpack.c.l.b16 %v67
    %v100 = vunpack.c.l.b16 %v68
    %v101 = vunpack.c.l.b16 %v69
    %v102 = vunpack.c.l.b16 %v70
    %v103 = vunpack.c.l.b16 %v71
    %v104 = vunpack.c.l.b16 %v72
    %v105 = vunpack.c.l.b16 %v73
    %v106 = vpack.c.b16 %v91, %v90
    %v107 = vpack.c.b16 %v93, %v92
    %v108 = vpack.c.b16 %v95, %v94
    %v109 = vpack.c.b16 %v97, %v96
    %v110 = vpack.c.b16 %v99, %v98
    %v111 = vpack.c.b16 %v101, %v100
    %v112 = vpack.c.b16 %v103, %v102
    %v113 = vpack.c.b16 %v105, %v104
    %122 = vmatpush.bf16.msra.mxu0 %v113
    %123 = vmatpush.bf16.msra.mxu0 %v112
    %124 = vmatpush.bf16.msra.mxu0 %v111
    %125 = vmatpush.bf16.msra.mxu0 %v110
    %126 = vmatpush.bf16.msra.mxu0 %v109
    %127 = vmatpush.bf16.msra.mxu0 %v108
    %128 = vmatpush.bf16.msra.mxu0 %v107
    %129 = vmatpush.bf16.msra.mxu0 %v106
    %130 = vmatmul.bf16.gmra.mxu0 %v57
    %v131 = vpop.f32.mrf.mxu0
    %v132 = vadd.f32 0.0, %v131
    %v133 = vpop.f32.mrf.mxu0
    %v134 = vadd.f32 0.0, %v133
    %135 = vdwg.mxu0
    %v136 = vadd.f32 %v53, %v132
    %v137 = vadd.f32 %v54, %v134
    %138 = vst [vmem:[#allocation2] sm:$0xff] %v136
    %139 = vst [vmem:[#allocation2 + $0x8] sm:$0xff] %v137
    // Predicated region
    $region26: #{tpu_custom_call.1} parent=1 // pred_check
      %p140 = pneg %p47
    $region27: #{tpu_custom_call.1} parent=1 // pred_check_branch
      %142 = sbr.rel (%p140) target = $region29
    $region28: #{tpu_custom_call.1} parent=1 // pred_region
      %v143 = vld [vmem:[#allocation2] sm:$0xff]
      %v144 = vld [vmem:[#allocation2 + $0x8] sm:$0xff]
      %v145 = vld [vmem:[%s2] sm:$0x1]
      %v147 = vperm.slane %v145, 0
      %v149 = vadd.f32 %v143, %v147
      %v150 = vadd.f32 %v144, %v147
      %151 = vst [vmem:[#allocation8] sm:$0xff] %v149
      %152 = vst [vmem:[#allocation8 + $0x8] sm:$0xff] %v150
    $region29: #{tpu_custom_call.1} parent=1 // pred_fallthru
      _
    // Predicated region
    $region30: #{tpu_custom_call.1} parent=1 // pred_check
      _
    $region31: #{tpu_custom_call.1} parent=1 // pred_check_branch
      %154 = sbr.rel (0) target = $region33
    $region32: #{tpu_custom_call.1} parent=1 // pred_region
      %156 = vsyncadd [#allocation5], 0
      %s157 = sshll.u32 [#allocation8], 4
      %s158 = int_to_ptr.vmem [resolvable:$true] %s157
      %s159 = sshll.u32 %s3, 4
      %s160 = int_to_ptr.hbm [resolvable:$true] %s159
      %165 = dma.vmem_to_hbm [thread:$0]  %s158, 256, %s160, [#allocation5], 128, 128, 8
    $region33: #{tpu_custom_call.1} parent=1 // pred_fallthru
      _
    // Predicated region
    $region34: #{tpu_custom_call.1} parent=1 // pred_check
      _
    $region35: #{tpu_custom_call.1} parent=1 // pred_check_branch
      %167 = sbr.rel (0) target = $region37
    $region36: #{tpu_custom_call.1} parent=1 // pred_region
      %169 = dma.done [#allocation5], 256
    $region37: #{tpu_custom_call.1} parent=1 // pred_fallthru
      _
    %170 = vsyncpa [#allocation4], 1
    %171 = vsyncpa [#allocation7], 1
    %172 = vsyncpa [#allocation5], 1

</llo_original>
